<compile_context>
chip_gen: v7x
topology: tpu7x:2x2x1
jax: 0.10.0
libtpu: 0.0.40
codegen_flags: <defaults>
</compile_context>

<pallas_src>
import jax
import jax.numpy as jnp
from jax.experimental import pallas as pl
from jax.experimental.pallas import tpu as pltpu


def _round_up(x, m):
    return ((x + m - 1) // m) * m


def _choose_tiling(B, batch_tile):
    """Returns (TB, nt, pad).  Small batches use one full-extent block (no padding
    pass, no (8,128) constraint); large batches get >= 2 lane-aligned tiles so the
    "parallel" grid axis can shard across both v7x TensorCores."""
    batch_tile = max(128, _round_up(int(batch_tile), 128))
    if B <= 256:
        return B, 1, 0
    TB = min(batch_tile, _round_up((B + 1) // 2, 128))
    Bp = _round_up(B, TB)
    return TB, Bp // TB, Bp - B


def _make_kernel(with_noise, c_sender, c_receiver, length_cost,
                 bl_loss, bl_length, erased_sym, true_b):
    """All module hyper-parameters are trace-time constants (closed over)."""

    def kernel(*refs):
        if with_noise:
            (msg_ref, noise_ref, logp_ref, ent_ref, rpack_ref,
             msg_out_ref, stats_ref) = refs
        else:
            (msg_ref, logp_ref, ent_ref, rpack_ref, stats_ref) = refs
            noise_ref = msg_out_ref = None

        msg = msg_ref[...].astype(jnp.int32)                       # (L, TB)
        L, TB = msg.shape
        trow = jax.lax.broadcasted_iota(jnp.int32, (L, TB), 0)     # time index per sublane

        # ---- find_lengths: first eos (symbol 0) + 1, clamped to L (sublane reduce) ----
        masked_pos = jnp.where(msg == 0, trow, L)
        first_zero = jnp.min(masked_pos, axis=0, keepdims=True)    # (1, TB)
        lengths_i = jnp.minimum(first_zero + 1, L)                 # (1, TB) int32
        lengths_f = lengths_i.astype(jnp.float32)

        # ---- ErasureChannel (2-D discrete path): erase where rand < p and
        #      position < length - 1 (exactly the PyTorch not_eosed rule). ----
        if with_noise:
            erase = jnp.logical_and(noise_ref[...] != 0, trow < (lengths_i - 1))
            msg_out_ref[...] = jnp.where(
                erase, jnp.int32(erased_sym), msg).astype(msg_out_ref.dtype)

        # ---- masked sender entropy / log-prob accumulation over time ----
        not_eosed = trow < lengths_i                               # bool, no f32 cvt
        ent_s = ent_ref[...].astype(jnp.float32)
        logp_s = logp_ref[...].astype(jnp.float32)
        # exact divide: only a (1, TB) row, accuracy over an approx reciprocal
        eff_ent_s = jnp.sum(jnp.where(not_eosed, ent_s, 0.0),
                            axis=0, keepdims=True) / lengths_f
        eff_logp_s = jnp.sum(jnp.where(not_eosed, logp_s, 0.0),
                             axis=0, keepdims=True)

        logp_r = rpack_ref[0:1, :]                                 # (1, TB)
        ent_r = rpack_ref[1:2, :]
        loss = rpack_ref[2:3, :]

        # ---- REINFORCE objective: per-sample terms (mean over batch outside) ----
        log_prob = eff_logp_s + logp_r
        length_loss = lengths_f * length_cost
        per_sample = ((length_loss - bl_length) * eff_logp_s       # policy_length_loss
                      + (loss - bl_loss) * log_prob                # policy_loss
                      + loss                                       # loss.mean() term
                      - (c_sender * eff_ent_s + c_receiver * ent_r))

        col = pl.program_id(0) * TB + jax.lax.broadcasted_iota(jnp.int32, (1, TB), 1)
        stats_ref[0:1, :] = lengths_f                              # lane-dense lengths
        stats_ref[1:2, :] = jnp.where(col < true_b, per_sample, 0.0)

    return kernel


def communication_rnn_reinforce(message, log_prob_s, entropy_s,
                                log_prob_r, entropy_r, loss, *,
                                erasure_pr, sender_entropy_coeff,
                                receiver_entropy_coeff, length_cost,
                                vocab_size, seed=42, noise_key=None,
                                apply_noise=True, baseline_loss=0.0,
                                baseline_length=0.0, batch_tile=8192):
    """Time-major inputs (as the sender emits them):
         message / log_prob_s / entropy_s : (L, B)   [int8 / bf16 recommended]
         log_prob_r / entropy_r / loss    : (B,)
       Returns (message_after_channel (L, B), message_length (B,) f32, optimized_loss)."""
    L, B = message.shape
    with_noise = bool(apply_noise) and float(erasure_pr) > 0.0

    TB, nt, pad = _choose_tiling(B, batch_tile)
    Bp = B + pad

    def padded(x):
        return x if pad == 0 else jnp.pad(x, ((0, 0), (0, pad)))

    rpack = padded(jnp.stack([log_prob_r.astype(jnp.float32),
                              entropy_r.astype(jnp.float32),
                              loss.astype(jnp.float32)], axis=0))   # (3, Bp) f32

    step_spec = pl.BlockSpec((L, TB), lambda t: (0, t))
    inputs = [padded(message)]
    in_specs = [step_spec]
    if with_noise:
        key = jax.random.PRNGKey(seed) if noise_key is None else noise_key
        noise = (jax.random.uniform(key, (L, B), dtype=jnp.float32)
                 < float(erasure_pr)).astype(jnp.int8)              # 1 B/element stream
        inputs.append(padded(noise))
        in_specs.append(step_spec)
    inputs += [padded(log_prob_s), padded(entropy_s), rpack]
    in_specs += [step_spec, step_spec, pl.BlockSpec((3, TB), lambda t: (0, t))]

    out_shapes, out_specs = [], []
    if with_noise:
        out_shapes.append(jax.ShapeDtypeStruct((L, Bp), message.dtype))
        out_specs.append(pl.BlockSpec((L, TB), lambda t: (0, t)))
    out_shapes.append(jax.ShapeDtypeStruct((2, Bp), jnp.float32))    # [lengths; partial]
    out_specs.append(pl.BlockSpec((2, TB), lambda t: (0, t)))

    kernel = _make_kernel(with_noise, float(sender_entropy_coeff),
                          float(receiver_entropy_coeff), float(length_cost),
                          float(baseline_loss), float(baseline_length),
                          int(vocab_size), B)

    outs = pl.pallas_call(
        kernel,
        out_shape=tuple(out_shapes),
        grid=(nt,),
        in_specs=in_specs,
        out_specs=tuple(out_specs),
        compiler_params=pltpu.CompilerParams(
            dimension_semantics=("parallel",),       # batch tiles shard across TCs (v7x)
            vmem_limit_bytes=48 * 1024 * 1024),      # safe on v7x's 64 MiB VMEM
    )(*inputs)

    if with_noise:
        msg_out, stats = outs
        if pad:
            msg_out = msg_out[:, :B]
    else:
        (stats,) = outs
        msg_out = message          # channel is a no-op: no extra (L, B) write stream
    lengths = stats[0, :B]
    optimized_loss = jnp.sum(stats[1]) / B
    return msg_out, lengths, optimized_loss


def _reference(message, logp_s, ent_s, logp_r, ent_r, loss, erase_draw,
               p, erased_symbol, c_s, c_r, lc, b_loss=0.0, b_len=0.0):
    """Pure-JAX mirror of the PyTorch forward (time-major (L, B) layout)."""
    L, B = message.shape
    pos = jnp.arange(L)[:, None]
    msg = message.astype(jnp.int32)
    first_zero = jnp.min(jnp.where(msg == 0, pos, L), axis=0)
    lengths_i = jnp.minimum(first_zero + 1, L)
    lengths = lengths_i.astype(jnp.float32)
    # ErasureChannel, 2-D discrete path
    erase = jnp.logical_and(erase_draw < p, pos < (lengths_i[None, :] - 1))
    msg_after = jnp.where(erase, erased_symbol, msg)
    # masked accumulation + REINFORCE objective
    mask = (pos < lengths_i[None, :]).astype(jnp.float32)
    eff_ent = (ent_s.astype(jnp.float32) * mask).sum(0) / lengths
    eff_lp = (logp_s.astype(jnp.float32) * mask).sum(0)
    w_ent = eff_ent.mean() * c_s + ent_r.mean() * c_r
    log_prob = eff_lp + logp_r
    length_loss = lengths * lc
    pll = ((length_loss - b_len) * eff_lp).mean()
    pls = ((loss - b_loss) * log_prob).mean()
    opt = pll + pls - w_ent + loss.mean()
    return msg_after, lengths, opt


if __name__ == "__main__":
    B, L, VOCAB = 16, 8, 10          # batch, max_len, vocab_size
    ERASE_P = 0.3
    C_S, C_R, LEN_COST = 0.1, 0.05, 0.01

    key = jax.random.PRNGKey(0)
    ks = jax.random.split(key, 7)
    # Simulated external agents, emitted time-major (L, B): sender symbols /
    # per-step stats, receiver per-sample stats, per-sample task loss.
    message    = jax.random.randint(ks[0], (L, B), 0, VOCAB).astype(jnp.int8)
    log_prob_s = (-jax.random.uniform(ks[1], (L, B), dtype=jnp.float32)).astype(jnp.bfloat16)
    entropy_s  = jax.random.uniform(ks[2], (L, B), dtype=jnp.float32).astype(jnp.bfloat16)
    log_prob_r = -jax.random.uniform(ks[3], (B,), dtype=jnp.float32)
    entropy_r  = jax.random.uniform(ks[4], (B,), dtype=jnp.float32)
    loss       = jax.random.uniform(ks[5], (B,), dtype=jnp.float32)
    noise_key  = ks[6]

    msg_out, lengths, opt_loss = communication_rnn_reinforce(
        message, log_prob_s, entropy_s, log_prob_r, entropy_r, loss,
        erasure_pr=ERASE_P, sender_entropy_coeff=C_S,
        receiver_entropy_coeff=C_R, length_cost=LEN_COST,
        vocab_size=VOCAB, noise_key=noise_key)
    jax.block_until_ready((msg_out, lengths, opt_loss))

    # Reference uses the exact same noise draw (same key, same construction),
    # so the whole forward — channel included — is checked bit-for-bit / to f32 tolerance.
    erase_draw = jax.random.uniform(noise_key, (L, B), dtype=jnp.float32)
    ref_msg, ref_len, ref_opt = _reference(
        message, log_prob_s, entropy_s, log_prob_r, entropy_r, loss,
        erase_draw, ERASE_P, VOCAB, C_S, C_R, LEN_COST)

    assert jnp.array_equal(msg_out.astype(jnp.int32), ref_msg), "message-after-channel mismatch"
    assert jnp.allclose(lengths, ref_len), "length mismatch"
    assert jnp.allclose(opt_loss, ref_opt, atol=1e-5, rtol=1e-5), "loss mismatch"

    # No-noise specialization: channel must be an identity and emit no new buffer.
    msg_out2, lengths2, opt_loss2 = communication_rnn_reinforce(
        message, log_prob_s, entropy_s, log_prob_r, entropy_r, loss,
        erasure_pr=0.0, sender_entropy_coeff=C_S,
        receiver_entropy_coeff=C_R, length_cost=LEN_COST,
        vocab_size=VOCAB, apply_noise=False)
    jax.block_until_ready((msg_out2, lengths2, opt_loss2))
    assert jnp.array_equal(msg_out2, message), "no-noise path altered the message"
    assert jnp.allclose(opt_loss2, ref_opt, atol=1e-5, rtol=1e-5), "no-noise loss mismatch"

    print("KERNEL_OK")
</pallas_src>

<mosaic_0001>
module attributes {stable_mosaic.version = 11 : i64} {
  func.func @kernel(%arg0: i32, %arg1: memref<8x16xi8, #tpu.memory_space<vmem>>, %arg2: memref<8x16xi8, #tpu.memory_space<vmem>>, %arg3: memref<8x16xbf16, #tpu.memory_space<vmem>>, %arg4: memref<8x16xbf16, #tpu.memory_space<vmem>>, %arg5: memref<3x16xf32, #tpu.memory_space<vmem>>, %arg6: memref<8x16xi8, #tpu.memory_space<vmem>>, %arg7: memref<2x16xf32, #tpu.memory_space<vmem>>) attributes {dimension_semantics = [#tpu.dimension_semantics<parallel>], iteration_bounds = array<i64: 1>, scalar_prefetch = 0 : i64, scratch_operands = 0 : i64, tpu.core_type = #tpu.core_type<tc>, window_params = [{transform_indices = @transform_0, window_bounds = array<i64: 8, 16>}, {transform_indices = @transform_1, window_bounds = array<i64: 8, 16>}, {transform_indices = @transform_2, window_bounds = array<i64: 8, 16>}, {transform_indices = @transform_3, window_bounds = array<i64: 8, 16>}, {transform_indices = @transform_4, window_bounds = array<i64: 3, 16>}, {transform_indices = @transform_5, window_bounds = array<i64: 8, 16>}, {transform_indices = @transform_6, window_bounds = array<i64: 2, 16>}]} {
    %c0 = arith.constant 0 : index
    %c0_0 = arith.constant 0 : index
    %0 = vector.load %arg1[%c0, %c0_0] : memref<8x16xi8, #tpu.memory_space<vmem>>, vector<8x16xi8>
    %1 = arith.extsi %0 : vector<8x16xi8> to vector<8x16xi32>
    %2 = tpu.iota {dimensions = array<i32: 0>} : vector<8x16xi32>
    %c0_i32 = arith.constant 0 : i32
    %3 = vector.broadcast %c0_i32 : i32 to vector<8x16xi32>
    %4 = arith.cmpi eq, %1, %3 : vector<8x16xi32>
    %c8_i32 = arith.constant 8 : i32
    %5 = vector.broadcast %c8_i32 : i32 to vector<8x16xi32>
    %6 = arith.select %4, %2, %5 : vector<8x16xi1>, vector<8x16xi32>
    %cst = arith.constant dense<2147483647> : vector<16xi32>
    %7 = vector.multi_reduction <minsi>, %6, %cst [0] : vector<8x16xi32> to vector<16xi32>
    %8 = vector.shape_cast %7 : vector<16xi32> to vector<1x16xi32>
    %c1_i32 = arith.constant 1 : i32
    %9 = vector.broadcast %c1_i32 : i32 to vector<1x16xi32>
    %10 = arith.addi %8, %9 : vector<1x16xi32>
    %c8_i32_1 = arith.constant 8 : i32
    %11 = vector.broadcast %c8_i32_1 : i32 to vector<1x16xi32>
    %12 = arith.minsi %10, %11 : vector<1x16xi32>
    %13 = arith.sitofp %12 : vector<1x16xi32> to vector<1x16xf32>
    %c0_2 = arith.constant 0 : index
    %c0_3 = arith.constant 0 : index
    %14 = vector.load %arg2[%c0_2, %c0_3] : memref<8x16xi8, #tpu.memory_space<vmem>>, vector<8x16xi8>
    %c0_i8 = arith.constant 0 : i8
    %15 = vector.broadcast %c0_i8 : i8 to vector<8x16xi8>
    %16 = arith.cmpi ne, %14, %15 : vector<8x16xi8>
    %c1_i32_4 = arith.constant 1 : i32
    %17 = vector.broadcast %c1_i32_4 : i32 to vector<1x16xi32>
    %18 = arith.subi %12, %17 : vector<1x16xi32>
    %19 = vector.broadcast %18 : vector<1x16xi32> to vector<8x16xi32>
    %20 = arith.cmpi slt, %2, %19 : vector<8x16xi32>
    %21 = arith.andi %16, %20 : vector<8x16xi1>
    %c10_i32 = arith.constant 10 : i32
    %22 = vector.broadcast %c10_i32 : i32 to vector<8x16xi32>
    %23 = arith.select %21, %22, %1 : vector<8x16xi1>, vector<8x16xi32>
    %24 = arith.trunci %23 : vector<8x16xi32> to vector<8x16xi8>
    %c0_5 = arith.constant 0 : index
    %c0_6 = arith.constant 0 : index
    %25 = vector.load %arg6[%c0_5, %c0_6] : memref<8x16xi8, #tpu.memory_space<vmem>>, vector<8x16xi8>
    tpu.vector_store %arg6[%c0_5, %c0_6], %24 {strides = array<i32>} : memref<8x16xi8, #tpu.memory_space<vmem>>, vector<8x16xi8>,
    %26 = vector.broadcast %12 : vector<1x16xi32> to vector<8x16xi32>
    %27 = arith.cmpi slt, %2, %26 : vector<8x16xi32>
    %c0_7 = arith.constant 0 : index
    %c0_8 = arith.constant 0 : index
    %28 = vector.load %arg4[%c0_7, %c0_8] : memref<8x16xbf16, #tpu.memory_space<vmem>>, vector<8x16xbf16>
    %29 = arith.extf %28 : vector<8x16xbf16> to vector<8x16xf32>
    %c0_9 = arith.constant 0 : index
    %c0_10 = arith.constant 0 : index
    %30 = vector.load %arg3[%c0_9, %c0_10] : memref<8x16xbf16, #tpu.memory_space<vmem>>, vector<8x16xbf16>
    %31 = arith.extf %30 : vector<8x16xbf16> to vector<8x16xf32>
    %cst_11 = arith.constant 0.000000e+00 : f32
    %32 = vector.broadcast %cst_11 : f32 to vector<8x16xf32>
    %33 = arith.select %27, %29, %32 : vector<8x16xi1>, vector<8x16xf32>
    %cst_12 = arith.constant dense<0.000000e+00> : vector<16xf32>
    %34 = vector.multi_reduction <add>, %33, %cst_12 [0] : vector<8x16xf32> to vector<16xf32>
    %35 = vector.shape_cast %34 : vector<16xf32> to vector<1x16xf32>
    %36 = arith.divf %35, %13 : vector<1x16xf32>
    %cst_13 = arith.constant 0.000000e+00 : f32
    %37 = vector.broadcast %cst_13 : f32 to vector<8x16xf32>
    %38 = arith.select %27, %31, %37 : vector<8x16xi1>, vector<8x16xf32>
    %cst_14 = arith.constant dense<0.000000e+00> : vector<16xf32>
    %39 = vector.multi_reduction <add>, %38, %cst_14 [0] : vector<8x16xf32> to vector<16xf32>
    %40 = vector.shape_cast %39 : vector<16xf32> to vector<1x16xf32>
    %c0_15 = arith.constant 0 : index
    %c0_16 = arith.constant 0 : index
    %41 = vector.load %arg5[%c0_15, %c0_16] : memref<3x16xf32, #tpu.memory_space<vmem>>, vector<1x16xf32>
    %c1 = arith.constant 1 : index
    %c0_17 = arith.constant 0 : index
    %42 = vector.load %arg5[%c1, %c0_17] : memref<3x16xf32, #tpu.memory_space<vmem>>, vector<1x16xf32>
    %c2 = arith.constant 2 : index
    %c0_18 = arith.constant 0 : index
    %43 = vector.load %arg5[%c2, %c0_18] : memref<3x16xf32, #tpu.memory_space<vmem>>, vector<1x16xf32>
    %44 = arith.addf %40, %41 : vector<1x16xf32>
    %cst_19 = arith.constant 0.00999999977 : f32
    %45 = vector.broadcast %cst_19 : f32 to vector<1x16xf32>
    %46 = arith.mulf %13, %45 : vector<1x16xf32>
    %cst_20 = arith.constant 0.000000e+00 : f32
    %47 = vector.broadcast %cst_20 : f32 to vector<1x16xf32>
    %48 = arith.subf %46, %47 : vector<1x16xf32>
    %49 = arith.mulf %48, %40 : vector<1x16xf32>
    %cst_21 = arith.constant 0.000000e+00 : f32
    %50 = vector.broadcast %cst_21 : f32 to vector<1x16xf32>
    %51 = arith.subf %43, %50 : vector<1x16xf32>
    %52 = arith.mulf %51, %44 : vector<1x16xf32>
    %53 = arith.addf %49, %52 : vector<1x16xf32>
    %54 = arith.addf %53, %43 : vector<1x16xf32>
    %cst_22 = arith.constant 1.000000e-01 : f32
    %55 = vector.broadcast %cst_22 : f32 to vector<1x16xf32>
    %56 = arith.mulf %55, %36 : vector<1x16xf32>
    %cst_23 = arith.constant 5.000000e-02 : f32
    %57 = vector.broadcast %cst_23 : f32 to vector<1x16xf32>
    %58 = arith.mulf %57, %42 : vector<1x16xf32>
    %59 = arith.addf %56, %58 : vector<1x16xf32>
    %60 = arith.subf %54, %59 : vector<1x16xf32>
    %c16_i32 = arith.constant 16 : i32
    %61 = arith.muli %arg0, %c16_i32 : i32
    %62 = tpu.iota {dimensions = array<i32: 1>} : vector<1x16xi32>
    %63 = vector.broadcast %61 : i32 to vector<1x16xi32>
    %64 = arith.addi %63, %62 : vector<1x16xi32>
    %c0_24 = arith.constant 0 : index
    %c0_25 = arith.constant 0 : index
    %65 = vector.load %arg7[%c0_24, %c0_25] : memref<2x16xf32, #tpu.memory_space<vmem>>, vector<1x16xf32>
    tpu.vector_store %arg7[%c0_24, %c0_25], %13 {strides = array<i32>} : memref<2x16xf32, #tpu.memory_space<vmem>>, vector<1x16xf32>,
    %c16_i32_26 = arith.constant 16 : i32
    %66 = vector.broadcast %c16_i32_26 : i32 to vector<1x16xi32>
    %67 = arith.cmpi slt, %64, %66 : vector<1x16xi32>
    %cst_27 = arith.constant 0.000000e+00 : f32
    %68 = vector.broadcast %cst_27 : f32 to vector<1x16xf32>
    %69 = arith.select %67, %60, %68 : vector<1x16xi1>, vector<1x16xf32>
    %c1_28 = arith.constant 1 : index
    %c0_29 = arith.constant 0 : index
    %70 = vector.load %arg7[%c1_28, %c0_29] : memref<2x16xf32, #tpu.memory_space<vmem>>, vector<1x16xf32>
    tpu.vector_store %arg7[%c1_28, %c0_29], %69 {strides = array<i32>} : memref<2x16xf32, #tpu.memory_space<vmem>>, vector<1x16xf32>,
    return
  }
  func.func @transform_0(%arg0: i32) -> (i32, i32) {
    %c0_i32 = arith.constant 0 : i32
    %c0_i32_0 = arith.constant 0 : i32
    return %c0_i32, %arg0 : i32, i32
  }
  func.func @transform_1(%arg0: i32) -> (i32, i32) {
    %c0_i32 = arith.constant 0 : i32
    %c0_i32_0 = arith.constant 0 : i32
    return %c0_i32, %arg0 : i32, i32
  }
  func.func @transform_2(%arg0: i32) -> (i32, i32) {
    %c0_i32 = arith.constant 0 : i32
    %c0_i32_0 = arith.constant 0 : i32
    return %c0_i32, %arg0 : i32, i32
  }
  func.func @transform_3(%arg0: i32) -> (i32, i32) {
    %c0_i32 = arith.constant 0 : i32
    %c0_i32_0 = arith.constant 0 : i32
    return %c0_i32, %arg0 : i32, i32
  }
  func.func @transform_4(%arg0: i32) -> (i32, i32) {
    %c0_i32 = arith.constant 0 : i32
    %c0_i32_0 = arith.constant 0 : i32
    return %c0_i32, %arg0 : i32, i32
  }
  func.func @transform_5(%arg0: i32) -> (i32, i32) {
    %c0_i32 = arith.constant 0 : i32
    %c0_i32_0 = arith.constant 0 : i32
    return %c0_i32, %arg0 : i32, i32
  }
  func.func @transform_6(%arg0: i32) -> (i32, i32) {
    %c0_i32 = arith.constant 0 : i32
    %c0_i32_0 = arith.constant 0 : i32
    return %c0_i32, %arg0 : i32, i32
  }
}

</mosaic_0001>

<llo_original>
// kernel: tpu_custom_call.1
$region0: #{tpu_custom_call.1}
  #allocation0 [shape = 'u32[]', space=smem, size = 0x4, offset = 0x4, fixed_abs, tag = 'smem constant byte address 0x4 - core index']
  #allocation1 [shape = 'u32[144,128]{1,0:T(1,128)}', space=vmem, size = 0x12000, scoped, tag = 'internal scratch']
  %s0 = inlined_call_operand.hbm [shape: s8[8,16], index: 0, kind: input, shape index: {}]
  %s1 = inlined_call_operand.vmem [shape: s8[8,16], index: 1, kind: input, shape index: {}]
  %s2 = inlined_call_operand.vmem [shape: bf16[8,16], index: 2, kind: input, shape index: {}]
  %s3 = inlined_call_operand.vmem [shape: bf16[8,16], index: 3, kind: input, shape index: {}]
  %s4 = inlined_call_operand.vmem [shape: f32[3,16], index: 4, kind: input, shape index: {}]
  %s5 = inlined_call_operand.hbm [shape: s8[8,16], index: 5, kind: output, shape index: {0}]
  %s6 = inlined_call_operand.hbm [shape: f32[2,16], index: 6, kind: output, shape index: {1}]
  %7 = xla_tuple %s5, %s6
  %s8 = sld [smem:[#allocation0]]
  $region42: #{tpu_custom_call.1} parent=0
    _
  %s10 = ssub.s32 1, %s8
  %s11 = scalar_select 0, %s10, %s8
  $region1: #{tpu_custom_call.1} parent=0
    #allocation2 [shape = 'u8[1024]{0}', space=vmem, size = 0x400, scoped, tag = 'input window, operand 0, single buffered']
    #allocation3 [shape = 's32[1]{0}', space=sflag, size = 0x4, scoped, tag = 'scoped memory for tpu_custom_call.1']
    #allocation4 [shape = 's32[1]{0}', space=sflag, size = 0x4, scoped, tag = 'scoped memory for tpu_custom_call.1']
    #allocation5 [shape = 'u8[1024]{0}', space=vmem, size = 0x400, scoped, tag = 'output window, operand 0, single buffered']
    #allocation6 [shape = 'u8[1024]{0}', space=vmem, size = 0x400, scoped, tag = 'output window, operand 1, single buffered']
    #allocation7 [shape = 's32[1]{0}', space=sflag, size = 0x4, scoped, tag = 'scoped memory for tpu_custom_call.1']
    %12 = vsyncpa [#allocation3], 0
    %13 = vsyncpa [#allocation4], 0
    %14 = vsyncpa [#allocation7], 0
    // Predicated region
    $region2: #{tpu_custom_call.1} parent=1 // pred_check
      _
    $region3: #{tpu_custom_call.1} parent=1 // pred_check_branch
      %16 = sbr.rel (0) target = $region5
    $region4: #{tpu_custom_call.1} parent=1 // pred_region
      %s18 = ssub.s32 32, 32
      %19 = vsyncadd [#allocation3], %s18
      %s21 = sshll.u32 [#allocation2], 4
      %s22 = int_to_ptr.vmem [resolvable:$true] %s21
      %24 = dma.hbm_to_vmem [thread:$0]  %s0, 32, %s22, [#allocation3]
    $region5: #{tpu_custom_call.1} parent=1 // pred_fallthru
      _
    // Predicated region
    $region6: #{tpu_custom_call.1} parent=1 // pred_check
      _
    $region7: #{tpu_custom_call.1} parent=1 // pred_check_branch
      %26 = sbr.rel (0) target = $region9
    $region8: #{tpu_custom_call.1} parent=1 // pred_region
      _
    $region9: #{tpu_custom_call.1} parent=1 // pred_fallthru
      _
    // Predicated region
    $region10: #{tpu_custom_call.1} parent=1 // pred_check
      _
    $region11: #{tpu_custom_call.1} parent=1 // pred_check_branch
      %28 = sbr.rel (0) target = $region13
    $region12: #{tpu_custom_call.1} parent=1 // pred_region
      _
    $region13: #{tpu_custom_call.1} parent=1 // pred_fallthru
      _
    // Predicated region
    $region14: #{tpu_custom_call.1} parent=1 // pred_check
      _
    $region15: #{tpu_custom_call.1} parent=1 // pred_check_branch
      %30 = sbr.rel (0) target = $region17
    $region16: #{tpu_custom_call.1} parent=1 // pred_region
      _
    $region17: #{tpu_custom_call.1} parent=1 // pred_fallthru
      _
    // Predicated region
    $region18: #{tpu_custom_call.1} parent=1 // pred_check
      _
    $region19: #{tpu_custom_call.1} parent=1 // pred_check_branch
      %32 = sbr.rel (0) target = $region21
    $region20: #{tpu_custom_call.1} parent=1 // pred_region
      _
    $region21: #{tpu_custom_call.1} parent=1 // pred_fallthru
      _
    // Predicated region
    $region22: #{tpu_custom_call.1} parent=1 // pred_check
      _
    $region23: #{tpu_custom_call.1} parent=1 // pred_check_branch
      %34 = sbr.rel (0) target = $region25
    $region24: #{tpu_custom_call.1} parent=1 // pred_region
      %35 = dma.done [#allocation3], 32
    $region25: #{tpu_custom_call.1} parent=1 // pred_fallthru
      _
    %v38 = vld [vmem:[#allocation2] sm:$0x3]
    %v39 = vunpack.c.0.s8 %v38
    %v40 = vlaneseq
    %v41 = vshrl.u32 %v40, 7
    %vm42 = vcmp.eq.s32.totalorder %v39, 0
    %v43 = vsel %vm42, %v41, 8
    %vm44 = vcmask 130048
    %v45 = vsel %vm44, %v43, 2147483647
    %v46 = vrot.slane %v45, 4
    %vm47 = vcmp.lt.s32.totalorder %v45, %v46
    %v48 = vsel %vm47, %v45, %v46
    %v49 = vrot.slane %v48, 2
    %vm50 = vcmp.lt.s32.totalorder %v48, %v49
    %v51 = vsel %vm50, %v48, %v49
    %v52 = vrot.slane %v51, 1
    %vm53 = vcmp.lt.s32.totalorder %v51, %v52
    %v54 = vsel %vm53, %v51, %v52
    %v55 = vadd.s32 %v54, 1
    %vm56 = vcmp.lt.s32.totalorder %v55, 8
    %v57 = vsel %vm56, %v55, 8
    %v58 = vcvt.s32.f32 %v57
    %v59 = vld [vmem:[%s1] sm:$0x3]
    %vm60 = vnez %v59
    %v61 = vsub.s32 %v57, 1
    %vm62 = vcmp.lt.s32.totalorder %v41, %v61
    %vm63 = vmpackc.low %vm62, %vm62
    %vm64 = vmpackc.even %vm63, %vm63
    %vm65 = vmand %vm60, %vm64
    %v66 = vsel %vm65, 16843009, 0
    %v67 = vunpack.c.0.s8 %v66
    %vm68 = vcmp.ne.s32.totalorder %v67, 0
    %v69 = vsel %vm68, 10, %v39
    %v70 = vpack.c.b16 %v69, %v69
    %v71 = vpack.c.b8 %v70, %v70
    %vm72 = vcmask 123904
    %73 = vst.msk [vmem:[#allocation5] sm:$0x3] %vm72, %v71
    %vm74 = vcmp.lt.s32.totalorder %v41, %v57
    %v75 = vld [vmem:[%s3] sm:$0xf]
    %v76 = vunpack.c.l.bf16 %v75
    %v77 = vld [vmem:[%s2] sm:$0xf]
    %v78 = vunpack.c.l.bf16 %v77
    %v79 = vsel %vm74, %v76, 0.0
    %v80 = vsel %vm44, %v79, 0.0
    %v81 = vrot.slane %v80, 4
    %v82 = vadd.f32 %v80, %v81
    %v83 = vrot.slane %v82, 2
    %v84 = vadd.f32 %v82, %v83
    %v85 = vrot.slane %v84, 1
    %v86 = vadd.f32 %v84, %v85
    %v87 = vrcp.pop %v58
    %v88 = vmul.f32 %v86, %v87
    %v89 = vsel %vm74, %v78, 0.0
    %v90 = vsel %vm44, %v89, 0.0
    %v91 = vrot.slane %v90, 4
    %v92 = vadd.f32 %v90, %v91
    %v93 = vrot.slane %v92, 2
    %v94 = vadd.f32 %v92, %v93
    %v95 = vrot.slane %v94, 1
    %v96 = vadd.f32 %v94, %v95
    %v97 = vld [vmem:[%s4] sm:$0x1]
    %v98 = vld [vmem:[%s4 + $0x1] sm:$0x1]
    %v99 = vld [vmem:[%s4 + $0x2] sm:$0x1]
    %v100 = vadd.f32 %v96, %v97
    %v101 = vmul.f32 %v58, 0.01
    %v102 = vmul.f32 %v101, %v96
    %v103 = vmul.f32 %v99, %v100
    %v104 = vadd.f32 %v102, %v103
    %v105 = vadd.f32 %v104, %v99
    %v106 = vmul.f32 %v88, 0.1
    %v107 = vmul.f32 %v98, 0.05
    %v108 = vadd.f32 %v106, %v107
    %v109 = vsub.f32 %v105, %v108
    %s110 = smul.u32 0, 16
    %v111 = vlaneseq
    %v112 = vand.u32 %v111, 127
    %v113 = vstv %s110
    %v114 = vadd.s32 %v113, %v112
    %vm115 = vcmask 122880
    %116 = vst.msk [vmem:[#allocation6] sm:$0x1] %vm115, %v58
    %vm117 = vcmp.lt.s32.totalorder %v114, 16
    %v118 = vsel %vm117, %v109, 0.0
    %119 = vst.msk [vmem:[#allocation6 + $0x1] sm:$0x1] %vm115, %v118
    // Predicated region
    $region26: #{tpu_custom_call.1} parent=1 // pred_check
      _
    $region27: #{tpu_custom_call.1} parent=1 // pred_check_branch
      %121 = sbr.rel (0) target = $region29
    $region28: #{tpu_custom_call.1} parent=1 // pred_region
      %s123 = ssub.s32 32, 32
      %124 = vsyncadd [#allocation4], %s123
      %s126 = sshll.u32 [#allocation5], 4
      %s127 = int_to_ptr.vmem [resolvable:$true] %s126
      %129 = dma.vmem_to_hbm [thread:$0]  %s127, 32, %s5, [#allocation4]
    $region29: #{tpu_custom_call.1} parent=1 // pred_fallthru
      _
    // Predicated region
    $region30: #{tpu_custom_call.1} parent=1 // pred_check
      _
    $region31: #{tpu_custom_call.1} parent=1 // pred_check_branch
      %131 = sbr.rel (0) target = $region33
    $region32: #{tpu_custom_call.1} parent=1 // pred_region
      %s133 = ssub.s32 32, 32
      %134 = vsyncadd [#allocation7], %s133
      %s136 = sshll.u32 [#allocation6], 4
      %s137 = int_to_ptr.vmem [resolvable:$true] %s136
      %139 = dma.vmem_to_hbm [thread:$0]  %s137, 32, %s6, [#allocation7]
    $region33: #{tpu_custom_call.1} parent=1 // pred_fallthru
      _
    // Predicated region
    $region34: #{tpu_custom_call.1} parent=1 // pred_check
      _
    $region35: #{tpu_custom_call.1} parent=1 // pred_check_branch
      %141 = sbr.rel (0) target = $region37
    $region36: #{tpu_custom_call.1} parent=1 // pred_region
      %142 = dma.done [#allocation4], 32
    $region37: #{tpu_custom_call.1} parent=1 // pred_fallthru
      _
    // Predicated region
    $region38: #{tpu_custom_call.1} parent=1 // pred_check
      _
    $region39: #{tpu_custom_call.1} parent=1 // pred_check_branch
      %144 = sbr.rel (0) target = $region41
    $region40: #{tpu_custom_call.1} parent=1 // pred_region
      %145 = dma.done [#allocation7], 32
    $region41: #{tpu_custom_call.1} parent=1 // pred_fallthru
      _
    %146 = vsyncpa [#allocation3], 1
    %147 = vsyncpa [#allocation4], 1
    %148 = vsyncpa [#allocation7], 1

</llo_original>
